<compile_context>
chip_gen: v7x
topology: tpu7x:2x2x1
jax: 0.10.0
libtpu: 0.0.40
codegen_flags: <defaults>
</compile_context>

<pallas_src>
import functools

import jax
import jax.numpy as jnp
from jax import lax
from jax.experimental import pallas as pl
from jax.experimental.pallas import tpu as pltpu

_ACC_ROWS = 8   # one f32 vreg worth of sublanes -> accumulator block is (8, LANES)


def _mse_partial_kernel(x_ref, t_ref, acc_ref, *, rows_total, tm, steps, inv_n, need_mask):
    """Accumulate sum((x - t)^2) over this core's row-tiles.

    acc_ref is this core's (8, LANES) f32 output block.  Its block index is constant
    along the 'arbitrary' reduction axis, so it stays resident in VMEM: zeroed at step 0,
    updated with plain VPU vreg adds every step, scaled by 1/n at the last step.
    """
    c = pl.program_id(0)   # core split       (parallel axis)
    i = pl.program_id(1)   # reduction step   (arbitrary axis)

    @pl.when(i == 0)
    def _init():
        acc_ref[...] = jnp.zeros_like(acc_ref)

    d = x_ref[...] - t_ref[...]
    if need_mask:
        # Logical (unclamped) first row of this tile.  Rows >= rows_total are masked out;
        # this covers both the ragged last tile and fully-duplicated (clamped) tiles.
        row0 = (c * steps + i) * tm
        row_ids = row0 + lax.broadcasted_iota(jnp.int32, x_ref.shape, 0)
        d = jnp.where(row_ids < rows_total, d, 0.0)
    sq = d * d

    if tm % _ACC_ROWS == 0:
        # Fold sublane-blocks of the tile with pure vreg adds (VPU only; no XLU per step).
        acc_ref[...] += sq.reshape(tm // _ACC_ROWS, _ACC_ROWS, sq.shape[-1]).sum(axis=0)
    else:
        # Tiny input: tile is less than one vreg tall.
        acc_ref[0:tm, :] += sq

    @pl.when(i == steps - 1)
    def _finalize():
        acc_ref[...] *= inv_n   # emit mean-scaled partials; wrapper sums a tiny slab


def content_loss_forward(base_img, syn_img, *, block_rows=512):
    """ContentLoss.forward: returns (base_img, loss), loss = mean((base_img - syn_img)^2)."""
    assert base_img.shape == syn_img.shape
    n_elem = base_img.size

    x = base_img if base_img.dtype == jnp.float32 else base_img.astype(jnp.float32)
    t = syn_img if syn_img.dtype == jnp.float32 else syn_img.astype(jnp.float32)

    # Lane width: the widest of {1024, 512, 256, 128} that divides n -> no pad copy at all.
    lanes = next((l for l in (1024, 512, 256, 128) if n_elem % l == 0), None)
    if lanes is None:
        # Oddball element count: pad the flat tail up to one 1024-lane row.  Pad values are
        # zero in BOTH operands, so they contribute 0 to the sum -> no in-kernel mask needed.
        lanes = 1024
        pad = (-n_elem) % lanes
        x2 = jnp.pad(x.reshape(-1), (0, pad)).reshape(-1, lanes)
        t2 = jnp.pad(t.reshape(-1), (0, pad)).reshape(-1, lanes)
    else:
        x2 = x.reshape(-1, lanes)
        t2 = t.reshape(-1, lanes)

    rows = x2.shape[0]

    # Row tile: multiple of 8 sublanes, sized so one input block is ~block_rows*1024 f32
    # elements (~2 MiB by default) => 2 inputs x 2 pipeline buffers ~= 8 MiB of VMEM,
    # safely inside the scoped limit on every generation (v5e 16 MiB, v6e/v7x 32 MiB).
    tm_cap = max((block_rows * 1024 // lanes) // _ACC_ROWS * _ACC_ROWS, _ACC_ROWS)
    if rows >= _ACC_ROWS:
        tm = min(tm_cap, (rows // _ACC_ROWS) * _ACC_ROWS)
    else:
        tm = rows   # block spans the full (tiny) row extent

    nblocks = pl.cdiv(rows, tm)          # row-tiles of real data
    # Split rows across the 2 TensorCores on v7x only when there are >= 2 tiles of work
    # (harmless sequential split on single-core v5e/v6e).
    splits = 2 if nblocks >= 2 else 1
    steps = pl.cdiv(nblocks, splits)     # reduction steps per core

    # Masking is only required when some tile is ragged (rows % tm != 0) or when a core
    # re-reads a clamped duplicate tile (splits * steps != nblocks).
    need_mask = (rows % tm != 0) or (splits * steps != nblocks)

    def in_map(c, i):
        # Clamp so the DMA never targets a tile past the array; duplicated (clamped)
        # tiles are fully masked to zero inside the kernel via rows_total.
        return (jnp.minimum(c * steps + i, nblocks - 1), 0)

    kernel = functools.partial(
        _mse_partial_kernel,
        rows_total=rows, tm=tm, steps=steps,
        inv_n=1.0 / float(n_elem), need_mask=need_mask)

    partials = pl.pallas_call(
        kernel,
        out_shape=jax.ShapeDtypeStruct((splits * _ACC_ROWS, lanes), jnp.float32),
        grid=(splits, steps),
        in_specs=[
            pl.BlockSpec((tm, lanes), in_map),
            pl.BlockSpec((tm, lanes), in_map),
        ],
        out_specs=pl.BlockSpec((_ACC_ROWS, lanes), lambda c, i: (c, 0)),
        compiler_params=pltpu.CompilerParams(
            dimension_semantics=("parallel", "arbitrary")),
    )(x2, t2)

    # Final fold of the mean-scaled per-core partials: at most 16x1024 f32, negligible.
    loss = jnp.sum(partials)

    # forward() returns its input unchanged (the loss is module state in PyTorch).
    return base_img, loss


if __name__ == "__main__":
    key = jax.random.PRNGKey(0)
    k1, k2 = jax.random.split(key)

    # Small NCHW shapes consistent with the module's image inputs.
    base_img = jax.random.normal(k1, (2, 4, 16, 16), dtype=jnp.float32)
    syn_img = jax.random.normal(k2, (2, 4, 16, 16), dtype=jnp.float32)  # detached target

    out_img, loss = content_loss_forward(base_img, syn_img)
    out_img, loss = jax.block_until_ready((out_img, loss))

    ref_loss = jnp.mean((base_img - syn_img) ** 2)
    assert jnp.allclose(loss, ref_loss, rtol=1e-5, atol=1e-6), (loss, ref_loss)
    assert jnp.array_equal(out_img, base_img)

    # Extra self-check exercising the multi-step / ragged-last-tile / core-split paths
    # (small block_rows forces several reduction steps while keeping shapes tiny).
    k3, k4 = jax.random.split(k2)
    base2 = jax.random.normal(k3, (5, 4, 32, 32), dtype=jnp.float32)  # 20 rows of 1024 lanes
    syn2 = jax.random.normal(k4, (5, 4, 32, 32), dtype=jnp.float32)
    _, loss2 = content_loss_forward(base2, syn2, block_rows=8)
    loss2 = jax.block_until_ready(loss2)
    ref2 = jnp.mean((base2 - syn2) ** 2)
    assert jnp.allclose(loss2, ref2, rtol=1e-5, atol=1e-6), (loss2, ref2)

    # Odd element count -> padded-tail path (no mask needed, pad contributes zero).
    k5, k6 = jax.random.split(k4)
    base3 = jax.random.normal(k5, (3, 7, 11), dtype=jnp.float32)   # 231 elems
    syn3 = jax.random.normal(k6, (3, 7, 11), dtype=jnp.float32)
    _, loss3 = content_loss_forward(base3, syn3)
    loss3 = jax.block_until_ready(loss3)
    ref3 = jnp.mean((base3 - syn3) ** 2)
    assert jnp.allclose(loss3, ref3, rtol=1e-5, atol=1e-6), (loss3, ref3)

    print("KERNEL_OK")
</pallas_src>

<mosaic_0001>
module attributes {stable_mosaic.version = 11 : i64} {
  func.func @_mse_partial_kernel(%arg0: i32, %arg1: i32, %arg2: memref<2x1024xf32, #tpu.memory_space<vmem>>, %arg3: memref<2x1024xf32, #tpu.memory_space<vmem>>, %arg4: memref<8x1024xf32, #tpu.memory_space<vmem>>) attributes {dimension_semantics = [#tpu.dimension_semantics<parallel>, #tpu.dimension_semantics<arbitrary>], iteration_bounds = array<i64: 1, 1>, scalar_prefetch = 0 : i64, scratch_operands = 0 : i64, tpu.core_type = #tpu.core_type<tc>, window_params = [{transform_indices = @transform_0, window_bounds = array<i64: 2, 1024>}, {transform_indices = @transform_1, window_bounds = array<i64: 2, 1024>}, {transform_indices = @transform_2, window_bounds = array<i64: 8, 1024>}]} {
    %c0_i32 = arith.constant 0 : i32
    %0 = arith.cmpi eq, %arg1, %c0_i32 : i32
    %1 = arith.extui %0 : i1 to i32
    %c0_i32_0 = arith.constant 0 : i32
    %2 = arith.cmpi ne, %1, %c0_i32_0 : i32
    scf.if %2 {
      %cst = arith.constant 0.000000e+00 : f32
      %13 = vector.broadcast %cst : f32 to vector<8x1024xf32>
      %c0_10 = arith.constant 0 : index
      %c0_11 = arith.constant 0 : index
      %14 = vector.load %arg4[%c0_10, %c0_11] : memref<8x1024xf32, #tpu.memory_space<vmem>>, vector<8x1024xf32>
      tpu.vector_store %arg4[%c0_10, %c0_11], %13 {strides = array<i32>} : memref<8x1024xf32, #tpu.memory_space<vmem>>, vector<8x1024xf32>,
    } else {
    }
    %c0 = arith.constant 0 : index
    %c0_1 = arith.constant 0 : index
    %3 = vector.load %arg2[%c0, %c0_1] : memref<2x1024xf32, #tpu.memory_space<vmem>>, vector<2x1024xf32>
    %c0_2 = arith.constant 0 : index
    %c0_3 = arith.constant 0 : index
    %4 = vector.load %arg3[%c0_2, %c0_3] : memref<2x1024xf32, #tpu.memory_space<vmem>>, vector<2x1024xf32>
    %5 = arith.subf %3, %4 : vector<2x1024xf32>
    %6 = arith.mulf %5, %5 : vector<2x1024xf32>
    %c0_4 = arith.constant 0 : index
    %c0_5 = arith.constant 0 : index
    %7 = vector.load %arg4[%c0_4, %c0_5] : memref<8x1024xf32, #tpu.memory_space<vmem>>, vector<2x1024xf32>
    %8 = arith.addf %7, %6 : vector<2x1024xf32>
    %c0_6 = arith.constant 0 : index
    %c0_7 = arith.constant 0 : index
    %9 = vector.load %arg4[%c0_6, %c0_7] : memref<8x1024xf32, #tpu.memory_space<vmem>>, vector<2x1024xf32>
    tpu.vector_store %arg4[%c0_6, %c0_7], %8 {strides = array<i32>} : memref<8x1024xf32, #tpu.memory_space<vmem>>, vector<2x1024xf32>,
    %c0_i32_8 = arith.constant 0 : i32
    %10 = arith.cmpi eq, %arg1, %c0_i32_8 : i32
    %11 = arith.extui %10 : i1 to i32
    %c0_i32_9 = arith.constant 0 : i32
    %12 = arith.cmpi ne, %11, %c0_i32_9 : i32
    scf.if %12 {
      %c0_10 = arith.constant 0 : index
      %c0_11 = arith.constant 0 : index
      %13 = vector.load %arg4[%c0_10, %c0_11] : memref<8x1024xf32, #tpu.memory_space<vmem>>, vector<8x1024xf32>
      %cst = arith.constant 4.8828125E-4 : f32
      %14 = vector.broadcast %cst : f32 to vector<8x1024xf32>
      %15 = arith.mulf %13, %14 : vector<8x1024xf32>
      %c0_12 = arith.constant 0 : index
      %c0_13 = arith.constant 0 : index
      %16 = vector.load %arg4[%c0_12, %c0_13] : memref<8x1024xf32, #tpu.memory_space<vmem>>, vector<8x1024xf32>
      tpu.vector_store %arg4[%c0_12, %c0_13], %15 {strides = array<i32>} : memref<8x1024xf32, #tpu.memory_space<vmem>>, vector<8x1024xf32>,
    } else {
    }
    return
  }
  func.func @transform_0(%arg0: i32, %arg1: i32) -> (i32, i32) {
    %c1_i32 = arith.constant 1 : i32
    %0 = arith.muli %arg0, %c1_i32 : i32
    %1 = arith.addi %0, %arg1 : i32
    %c0_i32 = arith.constant 0 : i32
    %2 = arith.minsi %1, %c0_i32 : i32
    %c0_i32_0 = arith.constant 0 : i32
    %c0_i32_1 = arith.constant 0 : i32
    return %2, %c0_i32_0 : i32, i32
  }
  func.func @transform_1(%arg0: i32, %arg1: i32) -> (i32, i32) {
    %c1_i32 = arith.constant 1 : i32
    %0 = arith.muli %arg0, %c1_i32 : i32
    %1 = arith.addi %0, %arg1 : i32
    %c0_i32 = arith.constant 0 : i32
    %2 = arith.minsi %1, %c0_i32 : i32
    %c0_i32_0 = arith.constant 0 : i32
    %c0_i32_1 = arith.constant 0 : i32
    return %2, %c0_i32_0 : i32, i32
  }
  func.func @transform_2(%arg0: i32, %arg1: i32) -> (i32, i32) {
    %c0_i32 = arith.constant 0 : i32
    %c0_i32_0 = arith.constant 0 : i32
    return %arg0, %c0_i32 : i32, i32
  }
}

</mosaic_0001>

<llo_original>
// kernel: tpu_custom_call.1
$region0: #{tpu_custom_call.1}
  #allocation0 [shape = 'u32[]', space=smem, size = 0x4, offset = 0x4, fixed_abs, tag = 'smem constant byte address 0x4 - core index']
  #allocation1 [shape = 'u32[144,128]{1,0:T(1,128)}', space=vmem, size = 0x12000, scoped, tag = 'internal scratch']
  %s0 = inlined_call_operand.hbm [shape: f32[2,1024], index: 0, kind: input, shape index: {}]
  %s1 = inlined_call_operand.hbm [shape: f32[2,1024], index: 1, kind: input, shape index: {}]
  %s2 = inlined_call_operand.hbm [shape: f32[8,1024], index: 2, kind: output, shape index: {}]
  %s3 = sld [smem:[#allocation0]]
  $region34: #{tpu_custom_call.1} parent=0
    _
  %s5 = ssub.s32 1, %s3
  %s6 = scalar_select 0, %s5, %s3
  $region1: #{tpu_custom_call.1} parent=0
    #allocation2 [shape = 'u8[8192]{0}', space=vmem, size = 0x2000, scoped, tag = 'input window, operand 0, single buffered']
    #allocation3 [shape = 's32[1]{0}', space=sflag, size = 0x4, scoped, tag = 'scoped memory for tpu_custom_call.1']
    #allocation4 [shape = 's32[1]{0}', space=sflag, size = 0x4, scoped, tag = 'scoped memory for tpu_custom_call.1']
    #allocation5 [shape = 'u8[8192]{0}', space=vmem, size = 0x2000, scoped, tag = 'input window, operand 1, single buffered']
    #allocation6 [shape = 's32[1]{0}', space=sflag, size = 0x4, scoped, tag = 'scoped memory for tpu_custom_call.1']
    #allocation7 [shape = 'u8[32768]{0}', space=vmem, size = 0x8000, scoped, tag = 'output window, operand 0, single buffered']
    %7 = vsyncpa [#allocation3], 0
    %8 = vsyncpa [#allocation6], 0
    %9 = vsyncpa [#allocation4], 0
    // Predicated region
    $region2: #{tpu_custom_call.1} parent=1 // pred_check
      _
    $region3: #{tpu_custom_call.1} parent=1 // pred_check_branch
      %11 = sbr.rel (0) target = $region5
    $region4: #{tpu_custom_call.1} parent=1 // pred_region
      %s12 = sadd.s32 0, 0
      %p13 = scmp.lt.s32.totalorder %s12, 0
      %s14 = scalar_select %p13, %s12, 0
      %s16 = ssub.s32 256, 256
      %17 = vsyncadd [#allocation3], %s16
      %s18 = smul.addr %s14, 8
      %s19 = smul.addr %s18, 32
      %s20 = scalar_lea.hbm %s0, %s19
      %s22 = sshll.u32 [#allocation2], 4
      %s23 = int_to_ptr.vmem [resolvable:$true] %s22
      %25 = dma.hbm_to_vmem [thread:$0]  %s20, 256, %s23, [#allocation3]
    $region5: #{tpu_custom_call.1} parent=1 // pred_fallthru
      _
    // Predicated region
    $region6: #{tpu_custom_call.1} parent=1 // pred_check
      _
    $region7: #{tpu_custom_call.1} parent=1 // pred_check_branch
      %27 = sbr.rel (0) target = $region9
    $region8: #{tpu_custom_call.1} parent=1 // pred_region
      %s28 = sadd.s32 0, 0
      %p29 = scmp.lt.s32.totalorder %s28, 0
      %s30 = scalar_select %p29, %s28, 0
      %s32 = ssub.s32 256, 256
      %33 = vsyncadd [#allocation6], %s32
      %s34 = smul.addr %s30, 8
      %s35 = smul.addr %s34, 32
      %s36 = scalar_lea.hbm %s1, %s35
      %s38 = sshll.u32 [#allocation5], 4
      %s39 = int_to_ptr.vmem [resolvable:$true] %s38
      %41 = dma.hbm_to_vmem [thread:$0]  %s36, 256, %s39, [#allocation6]
    $region9: #{tpu_custom_call.1} parent=1 // pred_fallthru
      _
    // Predicated region
    $region10: #{tpu_custom_call.1} parent=1 // pred_check
      _
    $region11: #{tpu_custom_call.1} parent=1 // pred_check_branch
      %43 = sbr.rel (0) target = $region13
    $region12: #{tpu_custom_call.1} parent=1 // pred_region
      %44 = dma.done [#allocation3], 256
    $region13: #{tpu_custom_call.1} parent=1 // pred_fallthru
      _
    // Predicated region
    $region14: #{tpu_custom_call.1} parent=1 // pred_check
      _
    $region15: #{tpu_custom_call.1} parent=1 // pred_check_branch
      %46 = sbr.rel (0) target = $region17
    $region16: #{tpu_custom_call.1} parent=1 // pred_region
      %47 = dma.done [#allocation6], 256
    $region17: #{tpu_custom_call.1} parent=1 // pred_fallthru
      _
    %s48 = sadd.s32 0, 0
    %p49 = scmp.lt.s32.totalorder %s48, 0
    %s50 = scalar_select %p49, %s48, 0
    %s51 = sadd.s32 0, 0
    %p52 = scmp.lt.s32.totalorder %s51, 0
    %s53 = scalar_select %p52, %s51, 0
    %p54 = scmp.eq.s32.totalorder 0, 0
    // Predicated region
    $region18: #{tpu_custom_call.1} parent=1 // pred_check
      %p55 = pneg %p54
    $region19: #{tpu_custom_call.1} parent=1 // pred_check_branch
      %57 = sbr.rel (%p55) target = $region21
    $region20: #{tpu_custom_call.1} parent=1 // pred_region
      %58 = vst [vmem:[#allocation7] sm:$0xff] 0.0
      %59 = vst [vmem:[#allocation7 + $0x8] sm:$0xff] 0.0
      %60 = vst [vmem:[#allocation7 + $0x10] sm:$0xff] 0.0
      %61 = vst [vmem:[#allocation7 + $0x18] sm:$0xff] 0.0
      %62 = vst [vmem:[#allocation7 + $0x20] sm:$0xff] 0.0
      %63 = vst [vmem:[#allocation7 + $0x28] sm:$0xff] 0.0
      %64 = vst [vmem:[#allocation7 + $0x30] sm:$0xff] 0.0
      %65 = vst [vmem:[#allocation7 + $0x38] sm:$0xff] 0.0
    $region21: #{tpu_custom_call.1} parent=1 // pred_fallthru
      _
    %v66 = vld [vmem:[#allocation2] sm:$0xff]
    %v67 = vld [vmem:[#allocation2 + $0x8] sm:$0xff]
    %v68 = vld [vmem:[#allocation5] sm:$0xff]
    %v69 = vld [vmem:[#allocation5 + $0x8] sm:$0xff]
    %v70 = vsub.f32 %v66, %v68
    %v71 = vsub.f32 %v67, %v69
    %v72 = vmul.f32 %v70, %v70
    %v73 = vmul.f32 %v71, %v71
    %v74 = vld [vmem:[#allocation7] sm:$0x3]
    %v75 = vld [vmem:[#allocation7 + $0x8] sm:$0x3]
    %v76 = vld [vmem:[#allocation7 + $0x10] sm:$0x3]
    %v77 = vld [vmem:[#allocation7 + $0x18] sm:$0x3]
    %v78 = vld [vmem:[#allocation7 + $0x20] sm:$0x3]
    %v79 = vld [vmem:[#allocation7 + $0x28] sm:$0x3]
    %v80 = vld [vmem:[#allocation7 + $0x30] sm:$0x3]
    %v81 = vld [vmem:[#allocation7 + $0x38] sm:$0x3]
    %v84 = vcombine.high %v72, %v72
    %v86 = vunpack.c.l.s4 1983009808
    %v87 = vunpack.c.0.s8 %v86
    %v88 = vlaneseq
    %v89 = vshrl.u32 %v88, 7
    %v90 = vsub.s32 %v87, %v89
    %v91 = vrot.slane %v72, %v90
    %v93 = vunpack.c.l.s4 1983009808
    %v94 = vunpack.c.0.s8 %v93
    %v95 = vlaneseq
    %v96 = vshrl.u32 %v95, 7
    %v97 = vsub.s32 %v94, %v96
    %v98 = vrot.slane %v84, %v97
    %v99 = vcombine.high %v91, %v91
    %v100 = vcombine.high %v98, %v98
    %v101 = vcombine.high %v73, %v73
    %v103 = vunpack.c.l.s4 1983009808
    %v104 = vunpack.c.0.s8 %v103
    %v105 = vlaneseq
    %v106 = vshrl.u32 %v105, 7
    %v107 = vsub.s32 %v104, %v106
    %v108 = vrot.slane %v73, %v107
    %v110 = vunpack.c.l.s4 1983009808
    %v111 = vunpack.c.0.s8 %v110
    %v112 = vlaneseq
    %v113 = vshrl.u32 %v112, 7
    %v114 = vsub.s32 %v111, %v113
    %v115 = vrot.slane %v101, %v114
    %v116 = vcombine.high %v108, %v108
    %v117 = vcombine.high %v115, %v115
    %v126 = vadd.f32 %v74, %v91
    %v127 = vadd.f32 %v75, %v99
    %v128 = vadd.f32 %v76, %v98
    %v129 = vadd.f32 %v77, %v100
    %v130 = vadd.f32 %v78, %v108
    %v131 = vadd.f32 %v79, %v116
    %v132 = vadd.f32 %v80, %v115
    %v133 = vadd.f32 %v81, %v117
    %134 = vst [vmem:[#allocation7] sm:$0x3] %v126
    %135 = vst [vmem:[#allocation7 + $0x8] sm:$0x3] %v127
    %136 = vst [vmem:[#allocation7 + $0x10] sm:$0x3] %v128
    %137 = vst [vmem:[#allocation7 + $0x18] sm:$0x3] %v129
    %138 = vst [vmem:[#allocation7 + $0x20] sm:$0x3] %v130
    %139 = vst [vmem:[#allocation7 + $0x28] sm:$0x3] %v131
    %140 = vst [vmem:[#allocation7 + $0x30] sm:$0x3] %v132
    %141 = vst [vmem:[#allocation7 + $0x38] sm:$0x3] %v133
    // Predicated region
    $region22: #{tpu_custom_call.1} parent=1 // pred_check
      %p142 = pneg %p54
    $region23: #{tpu_custom_call.1} parent=1 // pred_check_branch
      %144 = sbr.rel (%p142) target = $region25
    $region24: #{tpu_custom_call.1} parent=1 // pred_region
      %v145 = vld [vmem:[#allocation7] sm:$0xff]
      %v146 = vld [vmem:[#allocation7 + $0x8] sm:$0xff]
      %v147 = vld [vmem:[#allocation7 + $0x10] sm:$0xff]
      %v148 = vld [vmem:[#allocation7 + $0x18] sm:$0xff]
      %v149 = vld [vmem:[#allocation7 + $0x20] sm:$0xff]
      %v150 = vld [vmem:[#allocation7 + $0x28] sm:$0xff]
      %v151 = vld [vmem:[#allocation7 + $0x30] sm:$0xff]
      %v152 = vld [vmem:[#allocation7 + $0x38] sm:$0xff]
      %v153 = vmul.f32 %v145, 0.00048828125
      %v154 = vmul.f32 %v146, 0.00048828125
      %v155 = vmul.f32 %v147, 0.00048828125
      %v156 = vmul.f32 %v148, 0.00048828125
      %v157 = vmul.f32 %v149, 0.00048828125
      %v158 = vmul.f32 %v150, 0.00048828125
      %v159 = vmul.f32 %v151, 0.00048828125
      %v160 = vmul.f32 %v152, 0.00048828125
      %161 = vst [vmem:[#allocation7] sm:$0xff] %v153
      %162 = vst [vmem:[#allocation7 + $0x8] sm:$0xff] %v154
      %163 = vst [vmem:[#allocation7 + $0x10] sm:$0xff] %v155
      %164 = vst [vmem:[#allocation7 + $0x18] sm:$0xff] %v156
      %165 = vst [vmem:[#allocation7 + $0x20] sm:$0xff] %v157
      %166 = vst [vmem:[#allocation7 + $0x28] sm:$0xff] %v158
      %167 = vst [vmem:[#allocation7 + $0x30] sm:$0xff] %v159
      %168 = vst [vmem:[#allocation7 + $0x38] sm:$0xff] %v160
    $region25: #{tpu_custom_call.1} parent=1 // pred_fallthru
      _
    // Predicated region
    $region26: #{tpu_custom_call.1} parent=1 // pred_check
      _
    $region27: #{tpu_custom_call.1} parent=1 // pred_check_branch
      %170 = sbr.rel (0) target = $region29
    $region28: #{tpu_custom_call.1} parent=1 // pred_region
      %s172 = ssub.s32 1024, 1024
      %173 = vsyncadd [#allocation4], %s172
      %s175 = sshll.u32 [#allocation7], 4
      %s176 = int_to_ptr.vmem [resolvable:$true] %s175
      %178 = dma.vmem_to_hbm [thread:$0]  %s176, 1024, %s2, [#allocation4]
    $region29: #{tpu_custom_call.1} parent=1 // pred_fallthru
      _
    // Predicated region
    $region30: #{tpu_custom_call.1} parent=1 // pred_check
      _
    $region31: #{tpu_custom_call.1} parent=1 // pred_check_branch
      %180 = sbr.rel (0) target = $region33
    $region32: #{tpu_custom_call.1} parent=1 // pred_region
      %181 = dma.done [#allocation4], 1024
    $region33: #{tpu_custom_call.1} parent=1 // pred_fallthru
      _
    %182 = vsyncpa [#allocation3], 1
    %183 = vsyncpa [#allocation6], 1
    %184 = vsyncpa [#allocation4], 1

</llo_original>
